<compile_context>
chip_gen: v7x
topology: tpu7x:2x2x1
jax: 0.10.0
libtpu: 0.0.40
codegen_flags: <defaults>
</compile_context>

<pallas_src>
import jax
import jax.numpy as jnp
from jax.experimental import pallas as pl
from jax.experimental.pallas import tpu as pltpu


def _round_up(x: int, m: int) -> int:
    return ((x + m - 1) // m) * m


# ---------------------------------------------------------------------------
# Fused kernel
#   step 0 only:
#     x      = EOT rows (+ pos emb), gathered & padded in the wrapper (C_pad, D)
#     xn     = ln_final(x)                         (two-pass stats, f32)
#     tf     = xn @ text_projection                (bf16 operands, f32 acc)
#     txt_t  = (tf / ||tf||)^T  -> bf16 scratch    (one-time transpose, (E, C_pad))
#   every step (batch tile):
#     pf     = point_feats_tile @ pc_projection    (bf16 operands, f32 acc)
#     pfn    = pf / ||pf||                         (f32, then bf16)
#     logits = exp(logit_scale) * pfn @ txt_t      (standard contraction, lane-dense out)
# ---------------------------------------------------------------------------
def ulip_logits_kernel(scale_ref,                 # SMEM (1,1) f32 = exp(logit_scale)
                       eot_ref,                   # (C_pad, D) f32   constant block
                       gamma_ref, beta_ref,       # (1, D) f32       constant blocks
                       tproj_ref,                 # (D, E) bf16      constant block
                       pfeat_ref,                 # (TB, P) bf16     batch-tiled
                       pcproj_ref,                # (P, E) bf16      constant block
                       out_ref,                   # (TB, C_pad) f32  batch-tiled
                       txt_t_ref):                # VMEM scratch (E, C_pad) bf16

    # ---- text branch: compute once, keep resident in VMEM scratch ----
    @pl.when(pl.program_id(0) == 0)
    def _():
        x = eot_ref[...]                                            # (C_pad, D) f32
        # TODO(synk): ulip_model.transformer (CLIP text transformer) is an
        # external backbone not defined in this module; treated as identity,
        # so only the EOT rows are needed.
        # ln_final — two-pass statistics (centered variance), f32.
        mean = jnp.mean(x, axis=-1, keepdims=True)
        xc = x - mean
        var = jnp.mean(xc * xc, axis=-1, keepdims=True)
        xn = xc * jax.lax.rsqrt(var + 1e-5)
        xn = xn * gamma_ref[...] + beta_ref[...]
        # text projection on MXU: bf16 operands, f32 accumulation.
        tf = jnp.dot(xn.astype(jnp.bfloat16), tproj_ref[...],
                     preferred_element_type=jnp.float32)            # (C_pad, E) f32
        inv = jax.lax.rsqrt(jnp.sum(tf * tf, axis=-1, keepdims=True) + 1e-12)
        # one-time transpose -> (E, C_pad) so the logits matmul is a standard
        # contraction (no per-step XLU transpose of a constant block).
        txt_t_ref[...] = jnp.transpose(tf * inv).astype(jnp.bfloat16)

    # ---- point branch + scaled cosine logits (per batch tile) ----
    pf = jnp.dot(pfeat_ref[...], pcproj_ref[...],
                 preferred_element_type=jnp.float32)                # (TB, E) f32
    inv = jax.lax.rsqrt(jnp.sum(pf * pf, axis=-1, keepdims=True) + 1e-12)
    pfn = (pf * inv).astype(jnp.bfloat16)
    logits = jnp.dot(pfn, txt_t_ref[...],
                     preferred_element_type=jnp.float32)            # (TB, C_pad) f32
    out_ref[...] = scale_ref[0, 0] * logits


def ulip_prompt_logits_pallas(scale, x_eot, gamma, beta, text_proj_bf16,
                              point_feats_bf16, pc_proj_bf16, *,
                              batch_tile=256):
    """scale: (1,1) f32; x_eot: (C, D) f32; point_feats: (B, P) bf16."""
    C, D = x_eot.shape
    E = text_proj_bf16.shape[1]
    B, P = point_feats_bf16.shape

    # Lane-dense class axis for the logits output; sublane-dense batch tile.
    C_pad = _round_up(C, 128)
    TB = min(batch_tile, _round_up(B, 16))        # >= 16 sublanes (bf16 tile)
    B_pad = _round_up(B, TB)

    x_eot_p = jnp.pad(x_eot, ((0, C_pad - C), (0, 0)))
    pfeat_p = jnp.pad(point_feats_bf16, ((0, B_pad - B), (0, 0)))

    out = pl.pallas_call(
        ulip_logits_kernel,
        out_shape=jax.ShapeDtypeStruct((B_pad, C_pad), jnp.float32),
        grid=(B_pad // TB,),
        in_specs=[
            pl.BlockSpec(memory_space=pltpu.MemorySpace.SMEM),     # scale
            pl.BlockSpec((C_pad, D), lambda i: (0, 0)),            # EOT rows
            pl.BlockSpec((1, D), lambda i: (0, 0)),                # ln gamma
            pl.BlockSpec((1, D), lambda i: (0, 0)),                # ln beta
            pl.BlockSpec((D, E), lambda i: (0, 0)),                # text_projection (bf16)
            pl.BlockSpec((TB, P), lambda i: (i, 0)),               # point feats tile (bf16)
            pl.BlockSpec((P, E), lambda i: (0, 0)),                # pc_projection (bf16)
        ],
        out_specs=pl.BlockSpec((TB, C_pad), lambda i: (i, 0)),
        scratch_shapes=[pltpu.VMEM((E, C_pad), jnp.bfloat16)],
        compiler_params=pltpu.CompilerParams(
            # "arbitrary": the txt scratch is written at step 0 and reused by
            # later steps, so the batch axis must run sequentially on one core.
            dimension_semantics=("arbitrary",)),
        cost_estimate=pl.CostEstimate(
            flops=2 * C_pad * D * E + 2 * B_pad * P * E + 2 * B_pad * E * C_pad,
            transcendentals=2 * C_pad + B_pad,
            bytes_accessed=(C_pad * D * 4 + D * E * 2 + P * E * 2
                            + B_pad * P * 2 + B_pad * C_pad * 4)),
    )(scale, x_eot_p, gamma, beta, text_proj_bf16, pfeat_p, pc_proj_bf16)

    return out[:B, :C]


# ---------------------------------------------------------------------------
# CustomULIP forward (inference path -> prompt_logits)
# ---------------------------------------------------------------------------
def custom_ulip_forward(pts, params, *, batch_tile=256):
    token_suffix = params["token_suffix"]                  # (C, S_suf, D)
    pos_emb = params["pos_emb"]                            # (S, D)
    C, S_suf, D = token_suffix.shape
    n_ctx = params["text_ctx"].shape[0]

    # ---- VLPromptLearner + TextEncoder front-end ----
    # prompts = cat(prefix, ctx, suffix); with the transformer stubbed as
    # identity only the EOT row (tokenized_prompts.argmax(-1)) survives the
    # final gather, and it always lies in the suffix region
    # (SOS | ctx | classname EOT pad...).  Indices are clamped (Pallas does
    # not bounds-check block indexing; the gather itself is plain XLA here).
    eot_abs = jnp.clip(params["eot_idx"].astype(jnp.int32),
                       1 + n_ctx, pos_emb.shape[0] - 1)    # (C,) abs seq idx
    eot_rel = jnp.clip(eot_abs - (1 + n_ctx), 0, S_suf - 1)
    suffix_eot = token_suffix[jnp.arange(C), eot_rel]      # (C, D)
    pos_eot = jnp.take(pos_emb, eot_abs, axis=0)           # (C, D)
    x_eot = (suffix_eot + pos_eot).astype(jnp.float32)     # prompts + pos emb @ EOT
    # TODO(synk): once the real CLIP text transformer is inserted, the full
    # prefix|ctx|suffix sequence must be materialized and run through it.

    # ---- point_encoder(pts) ----
    # TODO(synk): PointBERT point encoder is an external backbone not defined
    # in this module; stubbed as mean-pool over points + linear.
    pooled = jnp.mean(pts, axis=1)                         # (B, 3)
    point_feats = pooled @ params["pe_w"] + params["pe_b"] # (B, pc_dim)

    scale = jnp.exp(params["logit_scale"]).reshape(1, 1).astype(jnp.float32)

    prompt_logits = ulip_prompt_logits_pallas(
        scale, x_eot,
        params["ln_gamma"], params["ln_beta"],
        params["text_proj"].astype(jnp.bfloat16),          # casts hoisted out of
        point_feats.astype(jnp.bfloat16),                  # the per-step kernel body
        params["pc_proj"].astype(jnp.bfloat16),
        batch_tile=batch_tile)

    # TODO(synk): training-path MAC losses (cross_entropy, frozen-teacher
    # features) depend on the frozen ULIP backbone; only the eval path
    # (prompt_logits) is produced here.
    return prompt_logits


# ---------------------------------------------------------------------------
# Pure-JAX reference (same bf16 cast points) for a correctness check.
# ---------------------------------------------------------------------------
def _reference_forward(pts, params):
    token_suffix = params["token_suffix"]
    C, S_suf, D = token_suffix.shape
    n_ctx = params["text_ctx"].shape[0]
    eot_abs = jnp.clip(params["eot_idx"].astype(jnp.int32),
                       1 + n_ctx, params["pos_emb"].shape[0] - 1)
    eot_rel = jnp.clip(eot_abs - (1 + n_ctx), 0, S_suf - 1)
    x = token_suffix[jnp.arange(C), eot_rel] + params["pos_emb"][eot_abs]
    mean = jnp.mean(x, -1, keepdims=True)
    xc = x - mean
    var = jnp.mean(xc * xc, -1, keepdims=True)
    xn = xc * jax.lax.rsqrt(var + 1e-5) * params["ln_gamma"] + params["ln_beta"]
    tf = jnp.dot(xn.astype(jnp.bfloat16), params["text_proj"].astype(jnp.bfloat16),
                 preferred_element_type=jnp.float32)
    txt = tf * jax.lax.rsqrt(jnp.sum(tf * tf, -1, keepdims=True) + 1e-12)
    pooled = jnp.mean(pts, axis=1)
    pfeat = (pooled @ params["pe_w"] + params["pe_b"]).astype(jnp.bfloat16)
    pf = jnp.dot(pfeat, params["pc_proj"].astype(jnp.bfloat16),
                 preferred_element_type=jnp.float32)
    pfn = pf * jax.lax.rsqrt(jnp.sum(pf * pf, -1, keepdims=True) + 1e-12)
    return jnp.exp(params["logit_scale"]) * jnp.dot(
        pfn.astype(jnp.bfloat16), txt.astype(jnp.bfloat16).T,
        preferred_element_type=jnp.float32)


if __name__ == "__main__":
    key = jax.random.PRNGKey(0)
    ks = jax.random.split(key, 10)

    # small synthetic shapes consistent with the module (lane-dense dims)
    n_cls, n_ctx, seq, txt_dim, embed = 16, 4, 16, 128, 128
    B, n_pts, pc_dim = 4, 64, 128
    s_suf = seq - 1 - n_ctx

    params = {
        "token_prefix": 0.02 * jax.random.normal(ks[0], (n_cls, 1, txt_dim), jnp.float32),
        "token_suffix": 0.02 * jax.random.normal(ks[1], (n_cls, s_suf, txt_dim), jnp.float32),
        "text_ctx":     0.02 * jax.random.normal(ks[2], (n_ctx, txt_dim), jnp.float32),
        "pos_emb":      0.01 * jax.random.normal(ks[3], (seq, txt_dim), jnp.float32),
        "ln_gamma":     jnp.ones((1, txt_dim), jnp.float32),
        "ln_beta":      jnp.zeros((1, txt_dim), jnp.float32),
        "text_proj":    0.02 * jax.random.normal(ks[4], (txt_dim, embed), jnp.float32),
        "pc_proj":      0.02 * jax.random.normal(ks[5], (pc_dim, embed), jnp.float32),
        "pe_w":         0.10 * jax.random.normal(ks[6], (3, pc_dim), jnp.float32),
        "pe_b":         jnp.zeros((pc_dim,), jnp.float32),
        "logit_scale":  jnp.float32(jnp.log(1.0 / 0.07)),
    }
    # tokenized_prompts.argmax(-1): per-class EOT index (always in the suffix
    # region, as with CLIP tokenization: SOS + ctx + name + EOT + pad)
    params["eot_idx"] = (1 + n_ctx + 2 + (jnp.arange(n_cls) % 3)).astype(jnp.int32)

    pts = jax.random.normal(ks[7], (B, n_pts, 3), jnp.float32)

    logits = jax.jit(custom_ulip_forward)(pts, params)
    jax.block_until_ready(logits)
    ref = _reference_forward(pts, params)

    assert logits.shape == (B, n_cls)
    assert bool(jnp.all(jnp.isfinite(logits)))
    max_diff = float(jnp.max(jnp.abs(logits - ref)))
    assert max_diff < 5e-2, f"kernel/reference mismatch: max |diff| = {max_diff}"
    print("KERNEL_OK")
</pallas_src>

<mosaic_0001>
module attributes {stable_mosaic.version = 11 : i64} {
  func.func @ulip_logits_kernel(%arg0: i32, %arg1: memref<1x1xf32, #tpu.memory_space<smem>>, %arg2: memref<128x128xf32, #tpu.memory_space<vmem>>, %arg3: memref<1x128xf32, #tpu.memory_space<vmem>>, %arg4: memref<1x128xf32, #tpu.memory_space<vmem>>, %arg5: memref<128x128xbf16, #tpu.memory_space<vmem>>, %arg6: memref<16x128xbf16, #tpu.memory_space<vmem>>, %arg7: memref<128x128xbf16, #tpu.memory_space<vmem>>, %arg8: memref<16x128xf32, #tpu.memory_space<vmem>>, %arg9: memref<128x128xbf16, #tpu.memory_space<vmem>>) attributes {dimension_semantics = [#tpu.dimension_semantics<arbitrary>], iteration_bounds = array<i64: 1>, scalar_prefetch = 0 : i64, scratch_operands = 1 : i64, tpu.core_type = #tpu.core_type<tc>, window_params = [{transform_indices = @transform_0, window_bounds = array<i64: 1, 1>}, {pipeline_mode = #tpu.pipeline_mode<synchronous>, transform_indices = @transform_1, window_bounds = array<i64: 128, 128>}, {pipeline_mode = #tpu.pipeline_mode<synchronous>, transform_indices = @transform_2, window_bounds = array<i64: 1, 128>}, {pipeline_mode = #tpu.pipeline_mode<synchronous>, transform_indices = @transform_3, window_bounds = array<i64: 1, 128>}, {pipeline_mode = #tpu.pipeline_mode<synchronous>, transform_indices = @transform_4, window_bounds = array<i64: 128, 128>}, {transform_indices = @transform_5, window_bounds = array<i64: 16, 128>}, {pipeline_mode = #tpu.pipeline_mode<synchronous>, transform_indices = @transform_6, window_bounds = array<i64: 128, 128>}, {transform_indices = @transform_7, window_bounds = array<i64: 16, 128>}]} {
    %c0_i32 = arith.constant 0 : i32
    %0 = arith.cmpi eq, %arg0, %c0_i32 : i32
    %1 = arith.extui %0 : i1 to i32
    %c0_i32_0 = arith.constant 0 : i32
    %2 = arith.cmpi ne, %1, %c0_i32_0 : i32
    scf.if %2 {
      %c0_13 = arith.constant 0 : index
      %c0_14 = arith.constant 0 : index
      %21 = vector.load %arg2[%c0_13, %c0_14] : memref<128x128xf32, #tpu.memory_space<vmem>>, vector<128x128xf32>
      %cst_15 = arith.constant dense<0.000000e+00> : vector<128xf32>
      %22 = vector.multi_reduction <add>, %21, %cst_15 [1] : vector<128x128xf32> to vector<128xf32>
      %23 = vector.shape_cast %22 : vector<128xf32> to vector<128x1xf32>
      %cst_16 = arith.constant 1.280000e+02 : f32
      %24 = vector.broadcast %cst_16 : f32 to vector<128x1xf32>
      %25 = arith.divf %23, %24 : vector<128x1xf32>
      %26 = vector.broadcast %25 : vector<128x1xf32> to vector<128x128xf32>
      %27 = arith.subf %21, %26 : vector<128x128xf32>
      %28 = arith.mulf %27, %27 : vector<128x128xf32>
      %cst_17 = arith.constant dense<0.000000e+00> : vector<128xf32>
      %29 = vector.multi_reduction <add>, %28, %cst_17 [1] : vector<128x128xf32> to vector<128xf32>
      %30 = vector.shape_cast %29 : vector<128xf32> to vector<128x1xf32>
      %cst_18 = arith.constant 1.280000e+02 : f32
      %31 = vector.broadcast %cst_18 : f32 to vector<128x1xf32>
      %32 = arith.divf %30, %31 : vector<128x1xf32>
      %cst_19 = arith.constant 9.99999974E-6 : f32
      %33 = vector.broadcast %cst_19 : f32 to vector<128x1xf32>
      %34 = arith.addf %32, %33 : vector<128x1xf32>
      %35 = math.rsqrt %34 : vector<128x1xf32>
      %36 = vector.broadcast %35 : vector<128x1xf32> to vector<128x128xf32>
      %37 = arith.mulf %27, %36 : vector<128x128xf32>
      %c0_20 = arith.constant 0 : index
      %c0_21 = arith.constant 0 : index
      %38 = vector.load %arg3[%c0_20, %c0_21] : memref<1x128xf32, #tpu.memory_space<vmem>>, vector<1x128xf32>
      %39 = vector.broadcast %38 : vector<1x128xf32> to vector<128x128xf32>
      %40 = arith.mulf %37, %39 : vector<128x128xf32>
      %c0_22 = arith.constant 0 : index
      %c0_23 = arith.constant 0 : index
      %41 = vector.load %arg4[%c0_22, %c0_23] : memref<1x128xf32, #tpu.memory_space<vmem>>, vector<1x128xf32>
      %42 = vector.broadcast %41 : vector<1x128xf32> to vector<128x128xf32>
      %43 = arith.addf %40, %42 : vector<128x128xf32>
      %44 = arith.truncf %43 : vector<128x128xf32> to vector<128x128xbf16>
      %c0_24 = arith.constant 0 : index
      %c0_25 = arith.constant 0 : index
      %45 = vector.load %arg5[%c0_24, %c0_25] : memref<128x128xbf16, #tpu.memory_space<vmem>>, vector<128x128xbf16>
      %cst_26 = arith.constant dense<0.000000e+00> : vector<128x128xf32>
      %46 = tpu.matmul %44, %45, %cst_26 {dimension_numbers = #tpu.dot_dimension_numbers<[1], [0], [0], [1], [0, 0, 1, 1], [], []>} : vector<128x128xbf16>, vector<128x128xbf16>, vector<128x128xf32> -> vector<128x128xf32>
      %47 = arith.mulf %46, %46 : vector<128x128xf32>
      %cst_27 = arith.constant dense<0.000000e+00> : vector<128xf32>
      %48 = vector.multi_reduction <add>, %47, %cst_27 [1] : vector<128x128xf32> to vector<128xf32>
      %49 = vector.shape_cast %48 : vector<128xf32> to vector<128x1xf32>
      %cst_28 = arith.constant 9.99999996E-13 : f32
      %50 = vector.broadcast %cst_28 : f32 to vector<128x1xf32>
      %51 = arith.addf %49, %50 : vector<128x1xf32>
      %52 = math.rsqrt %51 : vector<128x1xf32>
      %53 = vector.broadcast %52 : vector<128x1xf32> to vector<128x128xf32>
      %54 = arith.mulf %46, %53 : vector<128x128xf32>
      %55 = tpu.transpose %54, [1, 0] : vector<128x128xf32> -> vector<128x128xf32>
      %56 = arith.truncf %55 : vector<128x128xf32> to vector<128x128xbf16>
      %c0_29 = arith.constant 0 : index
      %c0_30 = arith.constant 0 : index
      %57 = vector.load %arg9[%c0_29, %c0_30] : memref<128x128xbf16, #tpu.memory_space<vmem>>, vector<128x128xbf16>
      tpu.vector_store %arg9[%c0_29, %c0_30], %56 {strides = array<i32>} : memref<128x128xbf16, #tpu.memory_space<vmem>>, vector<128x128xbf16>,
    } else {
    }
    %c0 = arith.constant 0 : index
    %c0_1 = arith.constant 0 : index
    %3 = vector.load %arg6[%c0, %c0_1] : memref<16x128xbf16, #tpu.memory_space<vmem>>, vector<16x128xbf16>
    %c0_2 = arith.constant 0 : index
    %c0_3 = arith.constant 0 : index
    %4 = vector.load %arg7[%c0_2, %c0_3] : memref<128x128xbf16, #tpu.memory_space<vmem>>, vector<128x128xbf16>
    %cst = arith.constant dense<0.000000e+00> : vector<16x128xf32>
    %5 = tpu.matmul %3, %4, %cst {dimension_numbers = #tpu.dot_dimension_numbers<[1], [0], [0], [1], [0, 0, 1, 1], [], []>} : vector<16x128xbf16>, vector<128x128xbf16>, vector<16x128xf32> -> vector<16x128xf32>
    %6 = arith.mulf %5, %5 : vector<16x128xf32>
    %cst_4 = arith.constant dense<0.000000e+00> : vector<16xf32>
    %7 = vector.multi_reduction <add>, %6, %cst_4 [1] : vector<16x128xf32> to vector<16xf32>
    %8 = vector.shape_cast %7 : vector<16xf32> to vector<16x1xf32>
    %cst_5 = arith.constant 9.99999996E-13 : f32
    %9 = vector.broadcast %cst_5 : f32 to vector<16x1xf32>
    %10 = arith.addf %8, %9 : vector<16x1xf32>
    %11 = math.rsqrt %10 : vector<16x1xf32>
    %12 = vector.broadcast %11 : vector<16x1xf32> to vector<16x128xf32>
    %13 = arith.mulf %5, %12 : vector<16x128xf32>
    %14 = arith.truncf %13 : vector<16x128xf32> to vector<16x128xbf16>
    %c0_6 = arith.constant 0 : index
    %c0_7 = arith.constant 0 : index
    %15 = vector.load %arg9[%c0_6, %c0_7] : memref<128x128xbf16, #tpu.memory_space<vmem>>, vector<128x128xbf16>
    %cst_8 = arith.constant dense<0.000000e+00> : vector<16x128xf32>
    %16 = tpu.matmul %14, %15, %cst_8 {dimension_numbers = #tpu.dot_dimension_numbers<[1], [0], [0], [1], [0, 0, 1, 1], [], []>} : vector<16x128xbf16>, vector<128x128xbf16>, vector<16x128xf32> -> vector<16x128xf32>
    %c0_9 = arith.constant 0 : index
    %c0_10 = arith.constant 0 : index
    %17 = memref.load %arg1[%c0_9, %c0_10] : memref<1x1xf32, #tpu.memory_space<smem>>
    %18 = vector.broadcast %17 : f32 to vector<16x128xf32>
    %19 = arith.mulf %18, %16 : vector<16x128xf32>
    %c0_11 = arith.constant 0 : index
    %c0_12 = arith.constant 0 : index
    %20 = vector.load %arg8[%c0_11, %c0_12] : memref<16x128xf32, #tpu.memory_space<vmem>>, vector<16x128xf32>
    tpu.vector_store %arg8[%c0_11, %c0_12], %19 {strides = array<i32>} : memref<16x128xf32, #tpu.memory_space<vmem>>, vector<16x128xf32>,
    return
  }
  func.func @transform_0(%arg0: i32) -> (i32, i32) {
    %c0_i32 = arith.constant 0 : i32
    %c0_i32_0 = arith.constant 0 : i32
    %c0_i32_1 = arith.constant 0 : i32
    return %c0_i32, %c0_i32_0 : i32, i32
  }
  func.func @transform_1(%arg0: i32) -> (i32, i32) {
    %c0_i32 = arith.constant 0 : i32
    %c0_i32_0 = arith.constant 0 : i32
    %c0_i32_1 = arith.constant 0 : i32
    return %c0_i32, %c0_i32_0 : i32, i32
  }
  func.func @transform_2(%arg0: i32) -> (i32, i32) {
    %c0_i32 = arith.constant 0 : i32
    %c0_i32_0 = arith.constant 0 : i32
    %c0_i32_1 = arith.constant 0 : i32
    return %c0_i32, %c0_i32_0 : i32, i32
  }
  func.func @transform_3(%arg0: i32) -> (i32, i32) {
    %c0_i32 = arith.constant 0 : i32
    %c0_i32_0 = arith.constant 0 : i32
    %c0_i32_1 = arith.constant 0 : i32
    return %c0_i32, %c0_i32_0 : i32, i32
  }
  func.func @transform_4(%arg0: i32) -> (i32, i32) {
    %c0_i32 = arith.constant 0 : i32
    %c0_i32_0 = arith.constant 0 : i32
    %c0_i32_1 = arith.constant 0 : i32
    return %c0_i32, %c0_i32_0 : i32, i32
  }
  func.func @transform_5(%arg0: i32) -> (i32, i32) {
    %c0_i32 = arith.constant 0 : i32
    %c0_i32_0 = arith.constant 0 : i32
    return %arg0, %c0_i32 : i32, i32
  }
  func.func @transform_6(%arg0: i32) -> (i32, i32) {
    %c0_i32 = arith.constant 0 : i32
    %c0_i32_0 = arith.constant 0 : i32
    %c0_i32_1 = arith.constant 0 : i32
    return %c0_i32, %c0_i32_0 : i32, i32
  }
  func.func @transform_7(%arg0: i32) -> (i32, i32) {
    %c0_i32 = arith.constant 0 : i32
    %c0_i32_0 = arith.constant 0 : i32
    return %arg0, %c0_i32 : i32, i32
  }
}

</mosaic_0001>

<llo_original>
// kernel: custom_ulip_forward.1
$region0: #{custom_ulip_forward.1}
  #allocation0 [shape = 'u32[]', space=smem, size = 0x4, offset = 0x4, fixed_abs, tag = 'smem constant byte address 0x4 - core index']
  #allocation1 [shape = 'u32[144,128]{1,0:T(1,128)}', space=vmem, size = 0x12000, scoped, tag = 'internal scratch']
  #allocation2 [shape = 'bf16[128,128]{1,0:T(16,128)(2,1)}', space=vmem, size = 0x8000, scoped, tag = 'scratch operand']
  #allocation3 [shape = 'f32[1,1]{1,0:T(1,128)S(6)}', space=smem, size = 0x200, scoped, tag = 'scoped memory for custom_ulip_forward.1']
  %s0 = inlined_call_operand.<no memory space> [shape: f32[1,1], index: 0, kind: input, shape index: {}]
  %s1 = inlined_call_operand.vmem [shape: f32[128,128], index: 1, kind: input, shape index: {}]
  %s2 = inlined_call_operand.vmem [shape: f32[1,128], index: 2, kind: input, shape index: {}]
  %s3 = inlined_call_operand.vmem [shape: f32[1,128], index: 3, kind: input, shape index: {}]
  %s4 = inlined_call_operand.vmem [shape: bf16[128,128], index: 4, kind: input, shape index: {}]
  %s5 = inlined_call_operand.vmem [shape: bf16[16,128], index: 5, kind: input, shape index: {}]
  %s6 = inlined_call_operand.vmem [shape: bf16[128,128], index: 6, kind: input, shape index: {}]
  %s7 = inlined_call_operand.vmem [shape: f32[16,128], index: 7, kind: output, shape index: {}]
  %s8 = sld [smem:[#allocation0]]
  $region42: #{custom_ulip_forward.1} parent=0
    _
  %s10 = ssub.s32 1, %s8
  %s11 = scalar_select 0, %s10, %s8
  %12 = sst [smem:[#allocation3]] %s0
  // Predicated region
  $region2: #{custom_ulip_forward.1} parent=0 // pred_check
    _
  $region3: #{custom_ulip_forward.1} parent=0 // pred_check_branch
    %14 = sbr.rel (0) target = $region5
  $region4: #{custom_ulip_forward.1} parent=0 // pred_region
    _
  $region5: #{custom_ulip_forward.1} parent=0 // pred_fallthru
    _
  // Predicated region
  $region6: #{custom_ulip_forward.1} parent=0 // pred_check
    _
  $region7: #{custom_ulip_forward.1} parent=0 // pred_check_branch
    %16 = sbr.rel (0) target = $region9
  $region8: #{custom_ulip_forward.1} parent=0 // pred_region
    _
  $region9: #{custom_ulip_forward.1} parent=0 // pred_fallthru
    _
  // Predicated region
  $region10: #{custom_ulip_forward.1} parent=0 // pred_check
    _
  $region11: #{custom_ulip_forward.1} parent=0 // pred_check_branch
    %18 = sbr.rel (0) target = $region13
  $region12: #{custom_ulip_forward.1} parent=0 // pred_region
    _
  $region13: #{custom_ulip_forward.1} parent=0 // pred_fallthru
    _
  // Predicated region
  $region14: #{custom_ulip_forward.1} parent=0 // pred_check
    _
  $region15: #{custom_ulip_forward.1} parent=0 // pred_check_branch
    %20 = sbr.rel (0) target = $region17
  $region16: #{custom_ulip_forward.1} parent=0 // pred_region
    _
  $region17: #{custom_ulip_forward.1} parent=0 // pred_fallthru
    _
  // Predicated region
  $region18: #{custom_ulip_forward.1} parent=0 // pred_check
    _
  $region19: #{custom_ulip_forward.1} parent=0 // pred_check_branch
    %22 = sbr.rel (0) target = $region21
  $region20: #{custom_ulip_forward.1} parent=0 // pred_region
    _
  $region21: #{custom_ulip_forward.1} parent=0 // pred_fallthru
    _
  // Predicated region
  $region22: #{custom_ulip_forward.1} parent=0 // pred_check
    _
  $region23: #{custom_ulip_forward.1} parent=0 // pred_check_branch
    %24 = sbr.rel (0) target = $region25
  $region24: #{custom_ulip_forward.1} parent=0 // pred_region
    _
  $region25: #{custom_ulip_forward.1} parent=0 // pred_fallthru
    _
  // Predicated region
  $region26: #{custom_ulip_forward.1} parent=0 // pred_check
    _
  $region27: #{custom_ulip_forward.1} parent=0 // pred_check_branch
    %26 = sbr.rel (0) target = $region29
  $region28: #{custom_ulip_forward.1} parent=0 // pred_region
    _
  $region29: #{custom_ulip_forward.1} parent=0 // pred_fallthru
    _
  %p28 = scmp.eq.s32.totalorder 0, 0
  // Predicated region
  $region30: #{custom_ulip_forward.1} parent=0 // pred_check
    %p29 = pneg %p28
  $region31: #{custom_ulip_forward.1} parent=0 // pred_check_branch
    %31 = sbr.rel (%p29) target = $region33
  $region32: #{custom_ulip_forward.1} parent=0 // pred_region
    %v32 = vld [vmem:[%s1] sm:$0xff]
    %v33 = vld [vmem:[%s1 + $0x8] sm:$0xff]
    %v34 = vld [vmem:[%s1 + $0x10] sm:$0xff]
    %v35 = vld [vmem:[%s1 + $0x18] sm:$0xff]
    %v36 = vld [vmem:[%s1 + $0x20] sm:$0xff]
    %v37 = vld [vmem:[%s1 + $0x28] sm:$0xff]
    %v38 = vld [vmem:[%s1 + $0x30] sm:$0xff]
    %v39 = vld [vmem:[%s1 + $0x38] sm:$0xff]
    %v40 = vld [vmem:[%s1 + $0x40] sm:$0xff]
    %v41 = vld [vmem:[%s1 + $0x48] sm:$0xff]
    %v42 = vld [vmem:[%s1 + $0x50] sm:$0xff]
    %v43 = vld [vmem:[%s1 + $0x58] sm:$0xff]
    %v44 = vld [vmem:[%s1 + $0x60] sm:$0xff]
    %v45 = vld [vmem:[%s1 + $0x68] sm:$0xff]
    %v46 = vld [vmem:[%s1 + $0x70] sm:$0xff]
    %v47 = vld [vmem:[%s1 + $0x78] sm:$0xff]
    %48 = vadd.xlane.f32.xlu0 %v32
    %v49 = vpop.xlane.xlu0 %48
    %50 = vadd.xlane.f32.xlu0 %v33
    %v51 = vpop.xlane.xlu0 %50
    %52 = vadd.xlane.f32.xlu0 %v34
    %v53 = vpop.xlane.xlu0 %52
    %54 = vadd.xlane.f32.xlu0 %v35
    %v55 = vpop.xlane.xlu0 %54
    %56 = vadd.xlane.f32.xlu0 %v36
    %v57 = vpop.xlane.xlu0 %56
    %58 = vadd.xlane.f32.xlu0 %v37
    %v59 = vpop.xlane.xlu0 %58
    %60 = vadd.xlane.f32.xlu0 %v38
    %v61 = vpop.xlane.xlu0 %60
    %62 = vadd.xlane.f32.xlu0 %v39
    %v63 = vpop.xlane.xlu0 %62
    %64 = vadd.xlane.f32.xlu0 %v40
    %v65 = vpop.xlane.xlu0 %64
    %66 = vadd.xlane.f32.xlu0 %v41
    %v67 = vpop.xlane.xlu0 %66
    %68 = vadd.xlane.f32.xlu0 %v42
    %v69 = vpop.xlane.xlu0 %68
    %70 = vadd.xlane.f32.xlu0 %v43
    %v71 = vpop.xlane.xlu0 %70
    %72 = vadd.xlane.f32.xlu0 %v44
    %v73 = vpop.xlane.xlu0 %72
    %74 = vadd.xlane.f32.xlu0 %v45
    %v75 = vpop.xlane.xlu0 %74
    %76 = vadd.xlane.f32.xlu0 %v46
    %v77 = vpop.xlane.xlu0 %76
    %78 = vadd.xlane.f32.xlu0 %v47
    %v79 = vpop.xlane.xlu0 %78
    %v80 = vrcp.pop 128.0
    %v81 = vmul.f32 %v49, %v80
    %v82 = vmul.f32 %v51, %v80
    %v83 = vmul.f32 %v53, %v80
    %v84 = vmul.f32 %v55, %v80
    %v85 = vmul.f32 %v57, %v80
    %v86 = vmul.f32 %v59, %v80
    %v87 = vmul.f32 %v61, %v80
    %v88 = vmul.f32 %v63, %v80
    %v89 = vmul.f32 %v65, %v80
    %v90 = vmul.f32 %v67, %v80
    %v91 = vmul.f32 %v69, %v80
    %v92 = vmul.f32 %v71, %v80
    %v93 = vmul.f32 %v73, %v80
    %v94 = vmul.f32 %v75, %v80
    %v95 = vmul.f32 %v77, %v80
    %v96 = vmul.f32 %v79, %v80
    %v97 = vsub.f32 %v32, %v81
    %v98 = vsub.f32 %v33, %v82
    %v99 = vsub.f32 %v34, %v83
    %v100 = vsub.f32 %v35, %v84
    %v101 = vsub.f32 %v36, %v85
    %v102 = vsub.f32 %v37, %v86
    %v103 = vsub.f32 %v38, %v87
    %v104 = vsub.f32 %v39, %v88
    %v105 = vsub.f32 %v40, %v89
    %v106 = vsub.f32 %v41, %v90
    %v107 = vsub.f32 %v42, %v91
    %v108 = vsub.f32 %v43, %v92
    %v109 = vsub.f32 %v44, %v93
    %v110 = vsub.f32 %v45, %v94
    %v111 = vsub.f32 %v46, %v95
    %v112 = vsub.f32 %v47, %v96
    %v113 = vmul.f32 %v97, %v97
    %v114 = vmul.f32 %v98, %v98
    %v115 = vmul.f32 %v99, %v99
    %v116 = vmul.f32 %v100, %v100
    %v117 = vmul.f32 %v101, %v101
    %v118 = vmul.f32 %v102, %v102
    %v119 = vmul.f32 %v103, %v103
    %v120 = vmul.f32 %v104, %v104
    %v121 = vmul.f32 %v105, %v105
    %v122 = vmul.f32 %v106, %v106
    %v123 = vmul.f32 %v107, %v107
    %v124 = vmul.f32 %v108, %v108
    %v125 = vmul.f32 %v109, %v109
    %v126 = vmul.f32 %v110, %v110
    %v127 = vmul.f32 %v111, %v111
    %v128 = vmul.f32 %v112, %v112
    %129 = vadd.xlane.f32.xlu0 %v113
    %v130 = vpop.xlane.xlu0 %129
    %131 = vadd.xlane.f32.xlu0 %v114
    %v132 = vpop.xlane.xlu0 %131
    %133 = vadd.xlane.f32.xlu0 %v115
    %v134 = vpop.xlane.xlu0 %133
    %135 = vadd.xlane.f32.xlu0 %v116
    %v136 = vpop.xlane.xlu0 %135
    %137 = vadd.xlane.f32.xlu0 %v117
    %v138 = vpop.xlane.xlu0 %137
    %139 = vadd.xlane.f32.xlu0 %v118
    %v140 = vpop.xlane.xlu0 %139
    %141 = vadd.xlane.f32.xlu0 %v119
    %v142 = vpop.xlane.xlu0 %141
    %143 = vadd.xlane.f32.xlu0 %v120
    %v144 = vpop.xlane.xlu0 %143
    %145 = vadd.xlane.f32.xlu0 %v121
    %v146 = vpop.xlane.xlu0 %145
    %147 = vadd.xlane.f32.xlu0 %v122
    %v148 = vpop.xlane.xlu0 %147
    %149 = vadd.xlane.f32.xlu0 %v123
    %v150 = vpop.xlane.xlu0 %149
    %151 = vadd.xlane.f32.xlu0 %v124
    %v152 = vpop.xlane.xlu0 %151
    %153 = vadd.xlane.f32.xlu0 %v125
    %v154 = vpop.xlane.xlu0 %153
    %155 = vadd.xlane.f32.xlu0 %v126
    %v156 = vpop.xlane.xlu0 %155
    %157 = vadd.xlane.f32.xlu0 %v127
    %v158 = vpop.xlane.xlu0 %157
    %159 = vadd.xlane.f32.xlu0 %v128
    %v160 = vpop.xlane.xlu0 %159
    %v161 = vmul.f32 %v130, %v80
    %v162 = vmul.f32 %v132, %v80
    %v163 = vmul.f32 %v134, %v80
    %v164 = vmul.f32 %v136, %v80
    %v165 = vmul.f32 %v138, %v80
    %v166 = vmul.f32 %v140, %v80
    %v167 = vmul.f32 %v142, %v80
    %v168 = vmul.f32 %v144, %v80
    %v169 = vmul.f32 %v146, %v80
    %v170 = vmul.f32 %v148, %v80
    %v171 = vmul.f32 %v150, %v80
    %v172 = vmul.f32 %v152, %v80
    %v173 = vmul.f32 %v154, %v80
    %v174 = vmul.f32 %v156, %v80
    %v175 = vmul.f32 %v158, %v80
    %v176 = vmul.f32 %v160, %v80
    %v177 = vadd.f32 %v161, 1e-05
    %v178 = vadd.f32 %v162, 1e-05
    %v179 = vadd.f32 %v163, 1e-05
    %v180 = vadd.f32 %v164, 1e-05
    %v181 = vadd.f32 %v165, 1e-05
    %v182 = vadd.f32 %v166, 1e-05
    %v183 = vadd.f32 %v167, 1e-05
    %v184 = vadd.f32 %v168, 1e-05
    %v185 = vadd.f32 %v169, 1e-05
    %v186 = vadd.f32 %v170, 1e-05
    %v187 = vadd.f32 %v171, 1e-05
    %v188 = vadd.f32 %v172, 1e-05
    %v189 = vadd.f32 %v173, 1e-05
    %v190 = vadd.f32 %v174, 1e-05
    %v191 = vadd.f32 %v175, 1e-05
    %v192 = vadd.f32 %v176, 1e-05
    %v193 = vrsqrt.pop %v177
    %v194 = vrsqrt.pop %v178
    %v195 = vrsqrt.pop %v179
    %v196 = vrsqrt.pop %v180
    %v197 = vrsqrt.pop %v181
    %v198 = vrsqrt.pop %v182
    %v199 = vrsqrt.pop %v183
    %v200 = vrsqrt.pop %v184
    %v201 = vrsqrt.pop %v185
    %v202 = vrsqrt.pop %v186
    %v203 = vrsqrt.pop %v187
    %v204 = vrsqrt.pop %v188
    %v205 = vrsqrt.pop %v189
    %v206 = vrsqrt.pop %v190
    %v207 = vrsqrt.pop %v191
    %v208 = vrsqrt.pop %v192
    %v209 = vmul.f32 %v97, %v193
    %v210 = vmul.f32 %v98, %v194
    %v211 = vmul.f32 %v99, %v195
    %v212 = vmul.f32 %v100, %v196
    %v213 = vmul.f32 %v101, %v197
    %v214 = vmul.f32 %v102, %v198
    %v215 = vmul.f32 %v103, %v199
    %v216 = vmul.f32 %v104, %v200
    %v217 = vmul.f32 %v105, %v201
    %v218 = vmul.f32 %v106, %v202
    %v219 = vmul.f32 %v107, %v203
    %v220 = vmul.f32 %v108, %v204
    %v221 = vmul.f32 %v109, %v205
    %v222 = vmul.f32 %v110, %v206
    %v223 = vmul.f32 %v111, %v207
    %v224 = vmul.f32 %v112, %v208
    %v225 = vld [vmem:[%s2] sm:$0x1]
    %v227 = vlaneseq
    %v228 = vshrl.u32 %v227, 7
    %v229 = vsub.s32 0, %v228
    %v230 = vrot.slane %v225, %v229
    %v232 = vmul.f32 %v209, %v230
    %v233 = vmul.f32 %v210, %v230
    %v234 = vmul.f32 %v211, %v230
    %v235 = vmul.f32 %v212, %v230
    %v236 = vmul.f32 %v213, %v230
    %v237 = vmul.f32 %v214, %v230
    %v238 = vmul.f32 %v215, %v230
    %v239 = vmul.f32 %v216, %v230
    %v240 = vmul.f32 %v217, %v230
    %v241 = vmul.f32 %v218, %v230
    %v242 = vmul.f32 %v219, %v230
    %v243 = vmul.f32 %v220, %v230
    %v244 = vmul.f32 %v221, %v230
    %v245 = vmul.f32 %v222, %v230
    %v246 = vmul.f32 %v223, %v230
    %v247 = vmul.f32 %v224, %v230
    %v248 = vld [vmem:[%s3] sm:$0x1]
    %v250 = vlaneseq
    %v251 = vshrl.u32 %v250, 7
    %v252 = vsub.s32 0, %v251
    %v253 = vrot.slane %v248, %v252
    %v255 = vadd.f32 %v232, %v253
    %v256 = vadd.f32 %v233, %v253
    %v257 = vadd.f32 %v234, %v253
    %v258 = vadd.f32 %v235, %v253
    %v259 = vadd.f32 %v236, %v253
    %v260 = vadd.f32 %v237, %v253
    %v261 = vadd.f32 %v238, %v253
    %v262 = vadd.f32 %v239, %v253
    %v263 = vadd.f32 %v240, %v253
    %v264 = vadd.f32 %v241, %v253
    %v265 = vadd.f32 %v242, %v253
    %v266 = vadd.f32 %v243, %v253
    %v267 = vadd.f32 %v244, %v253
    %v268 = vadd.f32 %v245, %v253
    %v269 = vadd.f32 %v246, %v253
    %v270 = vadd.f32 %v247, %v253
    %v271 = vpack.c.bf16 %v256, %v255
    %v272 = vpack.c.bf16 %v258, %v257
    %v273 = vpack.c.bf16 %v260, %v259
    %v274 = vpack.c.bf16 %v262, %v261
    %v275 = vpack.c.bf16 %v264, %v263
    %v276 = vpack.c.bf16 %v266, %v265
    %v277 = vpack.c.bf16 %v268, %v267
    %v278 = vpack.c.bf16 %v270, %v269
    %v279 = vld [vmem:[%s4] sm:$0xf]
    %v280 = vld [vmem:[%s4 + $0x4] sm:$0xf]
    %v281 = vld [vmem:[%s4 + $0x8] sm:$0xf]
    %v282 = vld [vmem:[%s4 + $0xc] sm:$0xf]
    %v283 = vld [vmem:[%s4 + $0x10] sm:$0xf]
    %v284 = vld [vmem:[%s4 + $0x14] sm:$0xf]
    %v285 = vld [vmem:[%s4 + $0x18] sm:$0xf]
    %v286 = vld [vmem:[%s4 + $0x1c] sm:$0xf]
    %v287 = vld [vmem:[%s4 + $0x20] sm:$0xf]
    %v288 = vld [vmem:[%s4 + $0x24] sm:$0xf]
    %v289 = vld [vmem:[%s4 + $0x28] sm:$0xf]
    %v290 = vld [vmem:[%s4 + $0x2c] sm:$0xf]
    %v291 = vld [vmem:[%s4 + $0x30] sm:$0xf]
    %v292 = vld [vmem:[%s4 + $0x34] sm:$0xf]
    %v293 = vld [vmem:[%s4 + $0x38] sm:$0xf]
    %v294 = vld [vmem:[%s4 + $0x3c] sm:$0xf]
    %v311 = vunpack.c.l.b16 %v279
    %v312 = vunpack.c.l.b16 %v280
    %v313 = vunpack.c.l.b16 %v281
    %v314 = vunpack.c.l.b16 %v282
    %v315 = vunpack.c.l.b16 %v283
    %v316 = vunpack.c.l.b16 %v284
    %v317 = vunpack.c.l.b16 %v285
    %v318 = vunpack.c.l.b16 %v286
    %v319 = vunpack.c.l.b16 %v287
    %v320 = vunpack.c.l.b16 %v288
    %v321 = vunpack.c.l.b16 %v289
    %v322 = vunpack.c.l.b16 %v290
    %v323 = vunpack.c.l.b16 %v291
    %v324 = vunpack.c.l.b16 %v292
    %v325 = vunpack.c.l.b16 %v293
    %v326 = vunpack.c.l.b16 %v294
    %v327 = vpack.c.b16 %v312, %v311
    %v328 = vpack.c.b16 %v314, %v313
    %v329 = vpack.c.b16 %v316, %v315
    %v330 = vpack.c.b16 %v318, %v317
    %v331 = vpack.c.b16 %v320, %v319
    %v332 = vpack.c.b16 %v322, %v321
    %v333 = vpack.c.b16 %v324, %v323
    %v334 = vpack.c.b16 %v326, %v325
    %343 = vmatprep.subr.bf16.mxu0 0
    %344 = vmatpush1.bf16.msra.mxu0 %v327
    %345 = vmatprep.subr.bf16.mxu0 0
    %346 = vmatpush1.bf16.msra.mxu0 %v328
    %347 = vmatprep.subr.bf16.mxu0 0
    %348 = vmatpush1.bf16.msra.mxu0 %v329
    %349 = vmatprep.subr.bf16.mxu0 0
    %350 = vmatpush1.bf16.msra.mxu0 %v330
    %351 = vmatprep.subr.bf16.mxu0 0
    %352 = vmatpush1.bf16.msra.mxu0 %v331
    %353 = vmatprep.subr.bf16.mxu0 0
    %354 = vmatpush1.bf16.msra.mxu0 %v332
    %355 = vmatprep.subr.bf16.mxu0 0
    %356 = vmatpush1.bf16.msra.mxu0 %v333
    %357 = vmatprep.subr.bf16.mxu0 0
    %358 = vmatpush1.bf16.msra.mxu0 %v334
    %359 = vmatprep.subr.bf16.mxu0 0
    %360 = vmatpush1.bf16.msra.mxu0 0
    %361 = vmatprep.subr.bf16.mxu0 0
    %362 = vmatpush1.bf16.msra.mxu0 0
    %363 = vmatprep.subr.bf16.mxu0 0
    %364 = vmatpush1.bf16.msra.mxu0 0
    %365 = vmatprep.subr.bf16.mxu0 0
    %366 = vmatpush1.bf16.msra.mxu0 0
    %367 = vmatprep.subr.bf16.mxu0 0
    %368 = vmatpush1.bf16.msra.mxu0 0
    %369 = vmatprep.subr.bf16.mxu0 0
    %370 = vmatpush1.bf16.msra.mxu0 0
    %371 = vmatprep.subr.bf16.mxu0 0
    %372 = vmatpush1.bf16.msra.mxu0 0
    %373 = vmatprep.subr.bf16.mxu0 0
    %374 = vmatpush1.bf16.msra.mxu0 0
    %375 = vmatprep.mubr.bf16.mxu0 0
    %376 = vmatmul.mubr.bf16.gmra.mrb[0].mxu0 %v271
    %v377 = vpop.f32.mrb[0].mxu0
    %v378 = vadd.f32 0.0, %v377
    %v379 = vpop.f32.mrb[0].mxu0
    %v380 = vpop.f32.mrb[0].mxu0
    %v381 = vadd.f32 0.0, %v380
    %v382 = vpop.f32.mrb[0].mxu0
    %383 = vmatprep.mubr.bf16.mxu0 0
    %384 = vmatmul.mubr.bf16.gmra.mrb[0].mxu0 %v272
    %v385 = vpop.f32.mrb[0].mxu0
    %v386 = vadd.f32 0.0, %v385
    %v387 = vpop.f32.mrb[0].mxu0
    %v388 = vpop.f32.mrb[0].mxu0
    %v389 = vadd.f32 0.0, %v388
    %v390 = vpop.f32.mrb[0].mxu0
    %391 = vmatprep.mubr.bf16.mxu0 0
    %392 = vmatmul.mubr.bf16.gmra.mrb[0].mxu0 %v273
    %v393 = vpop.f32.mrb[0].mxu0
    %v394 = vadd.f32 0.0, %v393
    %v395 = vpop.f32.mrb[0].mxu0
    %v396 = vpop.f32.mrb[0].mxu0
    %v397 = vadd.f32 0.0, %v396
    %v398 = vpop.f32.mrb[0].mxu0
    %399 = vmatprep.mubr.bf16.mxu0 0
    %400 = vmatmul.mubr.bf16.gmra.mrb[0].mxu0 %v274
    %v401 = vpop.f32.mrb[0].mxu0
    %v402 = vadd.f32 0.0, %v401
    %v403 = vpop.f32.mrb[0].mxu0
    %v404 = vpop.f32.mrb[0].mxu0
    %v405 = vadd.f32 0.0, %v404
    %v406 = vpop.f32.mrb[0].mxu0
    %407 = vmatprep.mubr.bf16.mxu0 0
    %408 = vmatmul.mubr.bf16.gmra.mrb[0].mxu0 %v275
    %v409 = vpop.f32.mrb[0].mxu0
    %v410 = vadd.f32 0.0, %v409
    %v411 = vpop.f32.mrb[0].mxu0
    %v412 = vpop.f32.mrb[0].mxu0
    %v413 = vadd.f32 0.0, %v412
    %v414 = vpop.f32.mrb[0].mxu0
    %415 = vmatprep.mubr.bf16.mxu0 0
    %416 = vmatmul.mubr.bf16.gmra.mrb[0].mxu0 %v276
    %v417 = vpop.f32.mrb[0].mxu0
    %v418 = vadd.f32 0.0, %v417
    %v419 = vpop.f32.mrb[0].mxu0
    %v420 = vpop.f32.mrb[0].mxu0
    %v421 = vadd.f32 0.0, %v420
    %v422 = vpop.f32.mrb[0].mxu0
    %423 = vmatprep.mubr.bf16.mxu0 0
    %424 = vmatmul.mubr.bf16.gmra.mrb[0].mxu0 %v277
    %v425 = vpop.f32.mrb[0].mxu0
    %v426 = vadd.f32 0.0, %v425
    %v427 = vpop.f32.mrb[0].mxu0
    %v428 = vpop.f32.mrb[0].mxu0
    %v429 = vadd.f32 0.0, %v428
    %v430 = vpop.f32.mrb[0].mxu0
    %431 = vmatprep.mubr.bf16.mxu0 0
    %432 = vmatmul.mubr.bf16.gmra.mrb[0].mxu0 %v278
    %v433 = vpop.f32.mrb[0].mxu0
    %v434 = vadd.f32 0.0, %v433
    %v435 = vpop.f32.mrb[0].mxu0
    %v436 = vpop.f32.mrb[0].mxu0
    %v437 = vadd.f32 0.0, %v436
    %v438 = vpop.f32.mrb[0].mxu0
    %439 = vdwg.mxu0
    %v440 = vmul.f32 %v378, %v378
    %v441 = vmul.f32 %v381, %v381
    %v442 = vmul.f32 %v386, %v386
    %v443 = vmul.f32 %v389, %v389
    %v444 = vmul.f32 %v394, %v394
    %v445 = vmul.f32 %v397, %v397
    %v446 = vmul.f32 %v402, %v402
    %v447 = vmul.f32 %v405, %v405
    %v448 = vmul.f32 %v410, %v410
    %v449 = vmul.f32 %v413, %v413
    %v450 = vmul.f32 %v418, %v418
    %v451 = vmul.f32 %v421, %v421
    %v452 = vmul.f32 %v426, %v426
    %v453 = vmul.f32 %v429, %v429
    %v454 = vmul.f32 %v434, %v434
    %v455 = vmul.f32 %v437, %v437
    %456 = vadd.xlane.f32.xlu0 %v440
    %v457 = vpop.xlane.xlu0 %456
    %458 = vadd.xlane.f32.xlu0 %v441
    %v459 = vpop.xlane.xlu0 %458
    %460 = vadd.xlane.f32.xlu0 %v442
    %v461 = vpop.xlane.xlu0 %460
    %462 = vadd.xlane.f32.xlu0 %v443
    %v463 = vpop.xlane.xlu0 %462
    %464 = vadd.xlane.f32.xlu0 %v444
    %v465 = vpop.xlane.xlu0 %464
    %466 = vadd.xlane.f32.xlu0 %v445
    %v467 = vpop.xlane.xlu0 %466
    %468 = vadd.xlane.f32.xlu0 %v446
    %v469 = vpop.xlane.xlu0 %468
    %470 = vadd.xlane.f32.xlu0 %v447
    %v471 = vpop.xlane.xlu0 %470
    %472 = vadd.xlane.f32.xlu0 %v448
    %v473 = vpop.xlane.xlu0 %472
    %474 = vadd.xlane.f32.xlu0 %v449
    %v475 = vpop.xlane.xlu0 %474
    %476 = vadd.xlane.f32.xlu0 %v450
    %v477 = vpop.xlane.xlu0 %476
    %478 = vadd.xlane.f32.xlu0 %v451
    %v479 = vpop.xlane.xlu0 %478
    %480 = vadd.xlane.f32.xlu0 %v452
    %v481 = vpop.xlane.xlu0 %480
    %482 = vadd.xlane.f32.xlu0 %v453
    %v483 = vpop.xlane.xlu0 %482
    %484 = vadd.xlane.f32.xlu0 %v454
    %v485 = vpop.xlane.xlu0 %484
    %486 = vadd.xlane.f32.xlu0 %v455
    %v487 = vpop.xlane.xlu0 %486
    %v488 = vadd.f32 %v457, 1e-12
    %v489 = vadd.f32 %v459, 1e-12
    %v490 = vadd.f32 %v461, 1e-12
    %v491 = vadd.f32 %v463, 1e-12
    %v492 = vadd.f32 %v465, 1e-12
    %v493 = vadd.f32 %v467, 1e-12
    %v494 = vadd.f32 %v469, 1e-12
    %v495 = vadd.f32 %v471, 1e-12
    %v496 = vadd.f32 %v473, 1e-12
    %v497 = vadd.f32 %v475, 1e-12
    %v498 = vadd.f32 %v477, 1e-12
    %v499 = vadd.f32 %v479, 1e-12
    %v500 = vadd.f32 %v481, 1e-12
    %v501 = vadd.f32 %v483, 1e-12
    %v502 = vadd.f32 %v485, 1e-12
    %v503 = vadd.f32 %v487, 1e-12
    %v504 = vrsqrt.pop %v488
    %v505 = vrsqrt.pop %v489
    %v506 = vrsqrt.pop %v490
    %v507 = vrsqrt.pop %v491
    %v508 = vrsqrt.pop %v492
    %v509 = vrsqrt.pop %v493
    %v510 = vrsqrt.pop %v494
    %v511 = vrsqrt.pop %v495
    %v512 = vrsqrt.pop %v496
    %v513 = vrsqrt.pop %v497
    %v514 = vrsqrt.pop %v498
    %v515 = vrsqrt.pop %v499
    %v516 = vrsqrt.pop %v500
    %v517 = vrsqrt.pop %v501
    %v518 = vrsqrt.pop %v502
    %v519 = vrsqrt.pop %v503
    %v520 = vmul.f32 %v378, %v504
    %v521 = vmul.f32 %v381, %v505
    %v522 = vmul.f32 %v386, %v506
    %v523 = vmul.f32 %v389, %v507
    %v524 = vmul.f32 %v394, %v508
    %v525 = vmul.f32 %v397, %v509
    %v526 = vmul.f32 %v402, %v510
    %v527 = vmul.f32 %v405, %v511
    %v528 = vmul.f32 %v410, %v512
    %v529 = vmul.f32 %v413, %v513
    %v530 = vmul.f32 %v418, %v514
    %v531 = vmul.f32 %v421, %v515
    %v532 = vmul.f32 %v426, %v516
    %v533 = vmul.f32 %v429, %v517
    %v534 = vmul.f32 %v434, %v518
    %v535 = vmul.f32 %v437, %v519
    %536 = vxpose.xlu0.b32.start [1/16] %v520, 128
    %537 = vxpose.xlu0.b32.cont [2/16] %v521, 128
    %538 = vxpose.xlu0.b32.cont [3/16] %v522, 128
    %539 = vxpose.xlu0.b32.cont [4/16] %v523, 128
    %540 = vxpose.xlu0.b32.cont [5/16] %v524, 128
    %541 = vxpose.xlu0.b32.cont [6/16] %v525, 128
    %542 = vxpose.xlu0.b32.cont [7/16] %v526, 128
    %543 = vxpose.xlu0.b32.cont [8/16] %v527, 128
    %544 = vxpose.xlu0.b32.cont [9/16] %v528, 128
    %545 = vxpose.xlu0.b32.cont [10/16] %v529, 128
    %546 = vxpose.xlu0.b32.cont [11/16] %v530, 128
    %547 = vxpose.xlu0.b32.cont [12/16] %v531, 128
    %548 = vxpose.xlu0.b32.cont [13/16] %v532, 128
    %549 = vxpose.xlu0.b32.cont [14/16] %v533, 128
    %550 = vxpose.xlu0.b32.cont [15/16] %v534, 128
    %551 = vxpose.xlu0.b32.end [16/16] %v535, 128
    %v552 = vpop.trf.xlu0
    %v553 = vpop.trf.xlu0
    %v554 = vpop.trf.xlu0
    %v555 = vpop.trf.xlu0
    %v556 = vpop.trf.xlu0
    %v557 = vpop.trf.xlu0
    %v558 = vpop.trf.xlu0
    %v559 = vpop.trf.xlu0
    %v560 = vpop.trf.xlu0
    %v561 = vpop.trf.xlu0
    %v562 = vpop.trf.xlu0
    %v563 = vpop.trf.xlu0
    %v564 = vpop.trf.xlu0
    %v565 = vpop.trf.xlu0
    %v566 = vpop.trf.xlu0
    %v567 = vpop.trf.xlu0
    %v568 = vpack.c.bf16 %v553, %v552
    %v569 = vpack.c.bf16 %v555, %v554
    %v570 = vpack.c.bf16 %v557, %v556
    %v571 = vpack.c.bf16 %v559, %v558
    %v572 = vpack.c.bf16 %v561, %v560
    %v573 = vpack.c.bf16 %v563, %v562
    %v574 = vpack.c.bf16 %v565, %v564
    %v575 = vpack.c.bf16 %v567, %v566
    %576 = vst [vmem:[#allocation2] sm:$0xff] %v568
    %577 = vst [vmem:[#allocation2 + $0x8] sm:$0xff] %v569
    %578 = vst [vmem:[#allocation2 + $0x10] sm:$0xff] %v570
    %579 = vst [vmem:[#allocation2 + $0x18] sm:$0xff] %v571
    %580 = vst [vmem:[#allocation2 + $0x20] sm:$0xff] %v572
    %581 = vst [vmem:[#allocation2 + $0x28] sm:$0xff] %v573
    %582 = vst [vmem:[#allocation2 + $0x30] sm:$0xff] %v574
    %583 = vst [vmem:[#allocation2 + $0x38] sm:$0xff] %v575
  $region33: #{custom_ulip_forward.1} parent=0 // pred_fallthru
    _
  %v584 = vld [vmem:[%s5] sm:$0xf]
  %v585 = vld [vmem:[%s5 + $0x4] sm:$0xf]
  %v586 = vld [vmem:[%s6] sm:$0xf]
  %v587 = vld [vmem:[%s6 + $0x4] sm:$0xf]
  %v588 = vld [vmem:[%s6 + $0x8] sm:$0xf]
  %v589 = vld [vmem:[%s6 + $0xc] sm:$0xf]
  %v590 = vld [vmem:[%s6 + $0x10] sm:$0xf]
  %v591 = vld [vmem:[%s6 + $0x14] sm:$0xf]
  %v592 = vld [vmem:[%s6 + $0x18] sm:$0xf]
  %v593 = vld [vmem:[%s6 + $0x1c] sm:$0xf]
  %v594 = vld [vmem:[%s6 + $0x20] sm:$0xf]
  %v595 = vld [vmem:[%s6 + $0x24] sm:$0xf]
  %v596 = vld [vmem:[%s6 + $0x28] sm:$0xf]
  %v597 = vld [vmem:[%s6 + $0x2c] sm:$0xf]
  %v598 = vld [vmem:[%s6 + $0x30] sm:$0xf]
  %v599 = vld [vmem:[%s6 + $0x34] sm:$0xf]
  %v600 = vld [vmem:[%s6 + $0x38] sm:$0xf]
  %v601 = vld [vmem:[%s6 + $0x3c] sm:$0xf]
  %v604 = vunpack.c.l.b16 %v584
  %v605 = vunpack.c.l.b16 %v585
  %v606 = vpack.c.b16 %v605, %v604
  %v624 = vunpack.c.l.b16 %v586
  %v625 = vunpack.c.l.b16 %v587
  %v626 = vunpack.c.l.b16 %v588
  %v627 = vunpack.c.l.b16 %v589
  %v628 = vunpack.c.l.b16 %v590
  %v629 = vunpack.c.l.b16 %v591
  %v630 = vunpack.c.l.b16 %v592
  %v631 = vunpack.c.l.b16 %v593
  %v632 = vunpack.c.l.b16 %v594
  %v633 = vunpack.c.l.b16 %v595
  %v634 = vunpack.c.l.b16 %v596
  %v635 = vunpack.c.l.b16 %v597
  %v636 = vunpack.c.l.b16 %v598
  %v637 = vunpack.c.l.b16 %v599
  %v638 = vunpack.c.l.b16 %v600
  %v639 = vunpack.c.l.b16 %v601
  %v640 = vpack.c.b16 %v625, %v624
  %v641 = vpack.c.b16 %v627, %v626
  %v642 = vpack.c.b16 %v629, %v628
  %v643 = vpack.c.b16 %v631, %v630
  %v644 = vpack.c.b16 %v633, %v632
  %v645 = vpack.c.b16 %v635, %v634
  %v646 = vpack.c.b16 %v637, %v636
  %v647 = vpack.c.b16 %v639, %v638
  %656 = vmatprep.subr.bf16.mxu0 0
  %657 = vmatpush1.bf16.msra.mxu0 %v640
  %658 = vmatprep.subr.bf16.mxu0 0
  %659 = vmatpush1.bf16.msra.mxu0 %v641
  %660 = vmatprep.subr.bf16.mxu0 0
  %661 = vmatpush1.bf16.msra.mxu0 %v642
  %662 = vmatprep.subr.bf16.mxu0 0
  %663 = vmatpush1.bf16.msra.mxu0 %v643
  %664 = vmatprep.subr.bf16.mxu0 0
  %665 = vmatpush1.bf16.msra.mxu0 %v644
  %666 = vmatprep.subr.bf16.mxu0 0
  %667 = vmatpush1.bf16.msra.mxu0 %v645
  %668 = vmatprep.subr.bf16.mxu0 0
  %669 = vmatpush1.bf16.msra.mxu0 %v646
  %670 = vmatprep.subr.bf16.mxu0 0
  %671 = vmatpush1.bf16.msra.mxu0 %v647
  %672 = vmatprep.subr.bf16.mxu0 0
  %673 = vmatpush1.bf16.msra.mxu0 0
  %674 = vmatprep.subr.bf16.mxu0 0
  %675 = vmatpush1.bf16.msra.mxu0 0
  %676 = vmatprep.subr.bf16.mxu0 0
  %677 = vmatpush1.bf16.msra.mxu0 0
  %678 = vmatprep.subr.bf16.mxu0 0
  %679 = vmatpush1.bf16.msra.mxu0 0
  %680 = vmatprep.subr.bf16.mxu0 0
  %681 = vmatpush1.bf16.msra.mxu0 0
  %682 = vmatprep.subr.bf16.mxu0 0
  %683 = vmatpush1.bf16.msra.mxu0 0
  %684 = vmatprep.subr.bf16.mxu0 0
  %685 = vmatpush1.bf16.msra.mxu0 0
  %686 = vmatprep.subr.bf16.mxu0 0
  %687 = vmatpush1.bf16.msra.mxu0 0
  %688 = vmatprep.mubr.bf16.mxu0 0
  %689 = vmatmul.mubr.bf16.gmra.mrb[0].mxu0 %v606
  %v690 = vpop.f32.mrb[0].mxu0
  %v691 = vadd.f32 0.0, %v690
  %v692 = vpop.f32.mrb[0].mxu0
  %v693 = vpop.f32.mrb[0].mxu0
  %v694 = vadd.f32 0.0, %v693
  %v695 = vpop.f32.mrb[0].mxu0
  %696 = vdwg.mxu0
  %v697 = vmul.f32 %v691, %v691
  %v698 = vmul.f32 %v694, %v694
  %699 = vadd.xlane.f32.xlu0 %v697
  %v700 = vpop.xlane.xlu0 %699
  %701 = vadd.xlane.f32.xlu0 %v698
  %v702 = vpop.xlane.xlu0 %701
  %v703 = vadd.f32 %v700, 1e-12
  %v704 = vadd.f32 %v702, 1e-12
  %v705 = vrsqrt.pop %v703
  %v706 = vrsqrt.pop %v704
  %v707 = vmul.f32 %v691, %v705
  %v708 = vmul.f32 %v694, %v706
  %v709 = vpack.c.bf16 %v708, %v707
  %v710 = vld [vmem:[#allocation2] sm:$0xff]
  %v711 = vld [vmem:[#allocation2 + $0x8] sm:$0xff]
  %v712 = vld [vmem:[#allocation2 + $0x10] sm:$0xff]
  %v713 = vld [vmem:[#allocation2 + $0x18] sm:$0xff]
  %v714 = vld [vmem:[#allocation2 + $0x20] sm:$0xff]
  %v715 = vld [vmem:[#allocation2 + $0x28] sm:$0xff]
  %v716 = vld [vmem:[#allocation2 + $0x30] sm:$0xff]
  %v717 = vld [vmem:[#allocation2 + $0x38] sm:$0xff]
  %718 = vmatprep.subr.bf16.mxu0 0
  %719 = vmatpush1.bf16.msra.mxu0 %v710
  %720 = vmatprep.subr.bf16.mxu0 0
  %721 = vmatpush1.bf16.msra.mxu0 %v711
  %722 = vmatprep.subr.bf16.mxu0 0
  %723 = vmatpush1.bf16.msra.mxu0 %v712
  %724 = vmatprep.subr.bf16.mxu0 0
  %725 = vmatpush1.bf16.msra.mxu0 %v713
  %726 = vmatprep.subr.bf16.mxu0 0
  %727 = vmatpush1.bf16.msra.mxu0 %v714
  %728 = vmatprep.subr.bf16.mxu0 0
  %729 = vmatpush1.bf16.msra.mxu0 %v715
  %730 = vmatprep.subr.bf16.mxu0 0
  %731 = vmatpush1.bf16.msra.mxu0 %v716
  %732 = vmatprep.subr.bf16.mxu0 0
  %733 = vmatpush1.bf16.msra.mxu0 %v717
  %734 = vmatprep.subr.bf16.mxu0 0
  %735 = vmatpush1.bf16.msra.mxu0 0
  %736 = vmatprep.subr.bf16.mxu0 0
  %737 = vmatpush1.bf16.msra.mxu0 0
  %738 = vmatprep.subr.bf16.mxu0 0
  %739 = vmatpush1.bf16.msra.mxu0 0
  %740 = vmatprep.subr.bf16.mxu0 0
  %741 = vmatpush1.bf16.msra.mxu0 0
  %742 = vmatprep.subr.bf16.mxu0 0
  %743 = vmatpush1.bf16.msra.mxu0 0
  %744 = vmatprep.subr.bf16.mxu0 0
  %745 = vmatpush1.bf16.msra.mxu0 0
  %746 = vmatprep.subr.bf16.mxu0 0
  %747 = vmatpush1.bf16.msra.mxu0 0
  %748 = vmatprep.subr.bf16.mxu0 0
  %749 = vmatpush1.bf16.msra.mxu0 0
  %750 = vmatprep.mubr.bf16.mxu0 0
  %751 = vmatmul.mubr.bf16.gmra.mrb[0].mxu0 %v709
  %v752 = vpop.f32.mrb[0].mxu0
  %v753 = vadd.f32 0.0, %v752
  %v754 = vpop.f32.mrb[0].mxu0
  %v755 = vpop.f32.mrb[0].mxu0
  %v756 = vadd.f32 0.0, %v755
  %v757 = vpop.f32.mrb[0].mxu0
  %758 = vdwg.mxu0
  %s759 = sld [smem:[#allocation3]]
  %v760 = vstv %s759
  %v761 = vmul.f32 %v760, %v753
  %v762 = vmul.f32 %v760, %v756
  %763 = vst [vmem:[%s7] sm:$0xff] %v761
  %764 = vst [vmem:[%s7 + $0x8] sm:$0xff] %v762
  // Predicated region
  $region34: #{custom_ulip_forward.1} parent=0 // pred_check
    _
  $region35: #{custom_ulip_forward.1} parent=0 // pred_check_branch
    %766 = sbr.rel (0) target = $region37
  $region36: #{custom_ulip_forward.1} parent=0 // pred_region
    _
  $region37: #{custom_ulip_forward.1} parent=0 // pred_fallthru
    _
  // Predicated region
  $region38: #{custom_ulip_forward.1} parent=0 // pred_check
    _
  $region39: #{custom_ulip_forward.1} parent=0 // pred_check_branch
    %768 = sbr.rel (0) target = $region41
  $region40: #{custom_ulip_forward.1} parent=0 // pred_region
    _
  $region41: #{custom_ulip_forward.1} parent=0 // pred_fallthru
    _

</llo_original>
